<compile_context>
chip_gen: v7x
topology: tpu7x:2x2x1
jax: 0.10.0
libtpu: 0.0.40
codegen_flags: <defaults>
</compile_context>

<pallas_src>
import functools
import math

import jax
import jax.numpy as jnp
import numpy as np
from jax.experimental import pallas as pl
from jax.experimental.pallas import tpu as pltpu


# ------------------------------------------------------------------
# small helpers
# ------------------------------------------------------------------
def _round_up(x, m):
    return (x + m - 1) // m * m


def _tile(dim, target):
    """Full dim if smaller than the target tile, else the target tile."""
    return dim if dim < target else target


def _pad_dim(x, axis, new_size):
    if x.shape[axis] == new_size:
        return x
    pads = [(0, 0)] * x.ndim
    pads[axis] = (0, new_size - x.shape[axis])
    return jnp.pad(x, pads)


def _compiler_params(dim_sem, vmem_bytes=None):
    kwargs = dict(dimension_semantics=dim_sem)
    if vmem_bytes is not None and vmem_bytes > 16 * 1024 * 1024:
        # Raise the scoped-VMEM ceiling (v5e default is 16 MiB), but stay well
        # under the v7x 64 MiB physical budget.
        kwargs["vmem_limit_bytes"] = int(
            min(max(vmem_bytes * 2, 32 * 1024 * 1024), 56 * 1024 * 1024)
        )
    return pltpu.CompilerParams(**kwargs)


# ------------------------------------------------------------------
# Kernel 1: 3-D tiled matmul  (x @ w), w already in (K, N) layout.
# ------------------------------------------------------------------
def _matmul_kernel(x_ref, w_ref, o_ref, acc_ref):
    @pl.when(pl.program_id(2) == 0)
    def _init():
        acc_ref[...] = jnp.zeros_like(acc_ref)

    acc_ref[...] += jnp.dot(
        x_ref[...], w_ref[...], preferred_element_type=jnp.float32
    )

    @pl.when(pl.program_id(2) == pl.num_programs(2) - 1)
    def _finalize():
        o_ref[...] = acc_ref[...].astype(o_ref.dtype)


def matmul(x, w, *, tm=256, tn=256, tk=512):
    """x: (M, K), w: (K, N) (pre-transposed).  Returns x @ w -> (M, N)."""
    M, K = x.shape
    K2, N = w.shape
    assert K == K2
    tm, tn, tk = _tile(M, tm), _tile(N, tn), _tile(K, tk)
    Mp, Np, Kp = _round_up(M, tm), _round_up(N, tn), _round_up(K, tk)
    xp = _pad_dim(_pad_dim(x, 0, Mp), 1, Kp)
    wp = _pad_dim(_pad_dim(w, 0, Kp), 1, Np)

    isz = x.dtype.itemsize
    vmem_est = 2 * (tm * tk + tk * tn + tm * tn) * isz + tm * tn * 4

    out = pl.pallas_call(
        _matmul_kernel,
        out_shape=jax.ShapeDtypeStruct((Mp, Np), x.dtype),
        grid=(Mp // tm, Np // tn, Kp // tk),
        in_specs=[
            pl.BlockSpec((tm, tk), lambda i, j, k: (i, k)),
            pl.BlockSpec((tk, tn), lambda i, j, k: (k, j)),
        ],
        out_specs=pl.BlockSpec((tm, tn), lambda i, j, k: (i, j)),
        scratch_shapes=[pltpu.VMEM((tm, tn), jnp.float32)],
        compiler_params=_compiler_params(
            ("parallel", "parallel", "arbitrary"), vmem_est
        ),
        cost_estimate=pl.CostEstimate(
            flops=int(2 * Mp * Np * Kp),
            transcendentals=0,
            bytes_accessed=int((Mp * Kp + Kp * Np + Mp * Np) * isz),
        ),
    )(xp, wp)
    if Mp != M or Np != N:
        out = out[:M, :N]
    return out


# ------------------------------------------------------------------
# Kernel 2: ChameleonLayerNorm (stats over head_dim, per-head gamma/beta)
#           fused with rotary position embedding.
# ------------------------------------------------------------------
def _qknorm_rope_kernel(x_ref, w_ref, b_ref, cos_ref, sin_ref, o_ref, *, use_roll):
    x = x_ref[...].astype(jnp.float32)                      # (tt, H, D)
    mean = jnp.mean(x, axis=-1, keepdims=True)
    var = jnp.mean(jnp.square(x - mean), axis=-1, keepdims=True)
    xn = (x - mean) * jax.lax.rsqrt(var + 1e-5)
    xn = xn * w_ref[...][None].astype(jnp.float32) + b_ref[...][None].astype(jnp.float32)

    cos = cos_ref[...][:, None, :].astype(jnp.float32)      # (tt, 1, D)
    sin = sin_ref[...][:, None, :].astype(jnp.float32)
    D = xn.shape[-1]
    if use_roll:
        # rotate_half via XLU roll + sign flip of the first half of lanes.
        rot = pltpu.roll(xn, D // 2, -1)                     # [x2, x1]
        lane = jax.lax.broadcasted_iota(jnp.int32, xn.shape, xn.ndim - 1)
        rot = jnp.where(lane < D // 2, -rot, rot)            # [-x2, x1]
    else:
        x1 = xn[..., : D // 2]
        x2 = xn[..., D // 2:]
        rot = jnp.concatenate((-x2, x1), axis=-1)
    o_ref[...] = (xn * cos + rot * sin).astype(o_ref.dtype)


def qknorm_rope(x, w, b, cos, sin, *, tt=256):
    """x: (T, H, D); w, b: (H, D); cos, sin: (T, D)."""
    T, H, D = x.shape
    tt = _tile(T, tt)
    Tp = _round_up(T, tt)
    xp, cosp, sinp = _pad_dim(x, 0, Tp), _pad_dim(cos, 0, Tp), _pad_dim(sin, 0, Tp)

    kernel = functools.partial(_qknorm_rope_kernel, use_roll=(D % 128 == 0))
    out = pl.pallas_call(
        kernel,
        out_shape=jax.ShapeDtypeStruct((Tp, H, D), x.dtype),
        grid=(Tp // tt,),
        in_specs=[
            pl.BlockSpec((tt, H, D), lambda i: (i, 0, 0)),
            pl.BlockSpec((H, D), lambda i: (0, 0)),
            pl.BlockSpec((H, D), lambda i: (0, 0)),
            pl.BlockSpec((tt, D), lambda i: (i, 0)),
            pl.BlockSpec((tt, D), lambda i: (i, 0)),
        ],
        out_specs=pl.BlockSpec((tt, H, D), lambda i: (i, 0, 0)),
        compiler_params=_compiler_params(("parallel",)),
    )(xp, w, b, cosp, sinp)
    return out if Tp == T else out[:T]


# ------------------------------------------------------------------
# Kernel 3: causal flash attention with online softmax, operating directly in
#           (B, S, H, D) layout (no wrapper transposes).
#   grid = (B, Sq/tq, Skv/tkv), kv axis last ('arbitrary').
#   Each step covers ALL heads -> full GQA K/V reuse.
#   The K/V index_map clamps the kv block index so causally-skipped tiles
#   don't trigger DMAs.
# ------------------------------------------------------------------
_MASK_VALUE = -1e30


def _flash_attn_kernel(q_ref, k_ref, v_ref, o_ref, q_sc, m_sc, l_sc, acc_sc,
                       *, n_rep, num_kv_heads, block_q, block_kv):
    num_heads = num_kv_heads * n_rep
    qi = pl.program_id(1)
    ki = pl.program_id(2)

    @pl.when(ki == 0)
    def _init():
        m_sc[...] = jnp.full_like(m_sc, -jnp.inf)
        l_sc[...] = jnp.zeros_like(l_sc)
        acc_sc[...] = jnp.zeros_like(acc_sc)
        # Relayout Q to head-major once per q tile (reused by every kv step).
        q = q_ref[0]                                           # (tq, H, D)
        for h in range(num_heads):
            q_sc[h] = q[:, h, :]

    # kv blocks entirely above the causal diagonal contribute nothing.
    @pl.when(ki * block_kv <= qi * block_q + (block_q - 1))
    def _compute():
        k = k_ref[0]                                           # (tkv, KVH, D)
        v = v_ref[0]

        # Causal mask is identical for all heads of this (q, kv) block pair.
        row = qi * block_q + jax.lax.broadcasted_iota(
            jnp.int32, (block_q, block_kv), 0)
        col = ki * block_kv + jax.lax.broadcasted_iota(
            jnp.int32, (block_q, block_kv), 1)
        causal = col <= row

        for g in range(num_kv_heads):                          # static unroll
            kh = k[:, g, :]                                    # (tkv, D)
            vh = v[:, g, :]
            for r in range(n_rep):                             # q heads sharing this kv head
                h = g * n_rep + r
                # 1/sqrt(D) is already folded into the q-norm weights.
                s = jax.lax.dot_general(
                    q_sc[h], kh, (((1,), (1,)), ((), ())),
                    preferred_element_type=jnp.float32)        # (tq, tkv)
                s = jnp.where(causal, s, _MASK_VALUE)

                m_prev = m_sc[:, pl.ds(h, 1)]                  # (tq, 1)
                l_prev = l_sc[:, pl.ds(h, 1)]
                m_new = jnp.maximum(m_prev, jnp.max(s, axis=-1, keepdims=True))
                alpha = jnp.exp(m_prev - m_new)
                p = jnp.exp(s - m_new)
                l_sc[:, pl.ds(h, 1)] = alpha * l_prev + jnp.sum(
                    p, axis=-1, keepdims=True)
                acc_sc[h] = alpha * acc_sc[h] + jax.lax.dot_general(
                    p.astype(vh.dtype), vh, (((1,), (0,)), ((), ())),
                    preferred_element_type=jnp.float32)
                m_sc[:, pl.ds(h, 1)] = m_new

    @pl.when(ki == pl.num_programs(2) - 1)
    def _finalize():
        outs = []
        for h in range(num_heads):
            inv_l = pl.reciprocal(l_sc[:, pl.ds(h, 1)], approx=True)
            outs.append((acc_sc[h] * inv_l).astype(o_ref.dtype))
        o_ref[0] = jnp.stack(outs, axis=1)                     # one dense (tq,H,D) store


def flash_attention(q, k, v, *, tq=256, tkv=256):
    """q: (B, S, H, D); k, v: (B, S, KVH, D) with H = KVH * n_rep.
    Returns attention output in (B, S, H, D)."""
    B, S, H, D = q.shape
    KVH = k.shape[2]
    n_rep = H // KVH
    tq, tkv = _tile(S, tq), _tile(S, tkv)
    Sq, Skv = _round_up(S, tq), _round_up(S, tkv)
    qp = _pad_dim(q, 1, Sq)
    kp = _pad_dim(k, 1, Skv)   # padded kv columns are killed by the causal mask
    vp = _pad_dim(v, 1, Skv)
    n_kv_blocks = Skv // tkv

    def q_index_map(b, i, j):
        return (b, i, 0, 0)

    def kv_index_map(b, i, j):
        # Clamp: above-diagonal steps re-request the already-resident block,
        # so no DMA is issued for causally skipped kv tiles.
        last_needed = jnp.minimum(((i + 1) * tq - 1) // tkv, n_kv_blocks - 1)
        return (b, jnp.minimum(j, last_needed), 0, 0)

    kernel = functools.partial(
        _flash_attn_kernel, n_rep=n_rep, num_kv_heads=KVH,
        block_q=tq, block_kv=tkv)

    isz = q.dtype.itemsize
    vmem_est = (2 * tq * H * D * isz            # q (double buffered)
                + 2 * 2 * tkv * KVH * D * isz   # k, v
                + 2 * tq * H * D * isz          # o
                + tq * H * D * isz              # q head-major scratch
                + tq * H * D * H // H * 0       # (kept simple)
                + H * tq * D * 4                # f32 accumulator
                + 2 * tq * H * 4)               # m / l stats

    out = pl.pallas_call(
        kernel,
        out_shape=jax.ShapeDtypeStruct((B, Sq, H, D), q.dtype),
        grid=(B, Sq // tq, n_kv_blocks),
        in_specs=[
            pl.BlockSpec((1, tq, H, D), q_index_map),
            pl.BlockSpec((1, tkv, KVH, D), kv_index_map),
            pl.BlockSpec((1, tkv, KVH, D), kv_index_map),
        ],
        out_specs=pl.BlockSpec((1, tq, H, D), q_index_map),
        scratch_shapes=[
            pltpu.VMEM((H, tq, D), q.dtype),      # head-major Q copy
            pltpu.VMEM((tq, H), jnp.float32),     # running max per (row, head)
            pltpu.VMEM((tq, H), jnp.float32),     # running sum per (row, head)
            pltpu.VMEM((H, tq, D), jnp.float32),  # per-head output accumulator
        ],
        compiler_params=_compiler_params(
            ("parallel", "parallel", "arbitrary"), vmem_est),
        cost_estimate=pl.CostEstimate(
            flops=int(4 * B * H * Sq * Skv * D),
            transcendentals=int(B * H * Sq * Skv),
            bytes_accessed=int((2 * B * Sq * H * D + 2 * B * Skv * KVH * D) * isz),
        ),
    )(qp, kp, vp)
    return out if Sq == S else out[:, :S]


# ------------------------------------------------------------------
# Glue: rotary cos/sin table (matches ChameleonRotaryEmbedding).
# ------------------------------------------------------------------
def rotary_cos_sin(position_ids, head_dim, base, dtype):
    inv_freq = 1.0 / (
        base ** (jnp.arange(0, head_dim, 2, dtype=jnp.float32) / head_dim)
    )
    freqs = position_ids[..., None].astype(jnp.float32) * inv_freq[None, None, :]
    emb = jnp.concatenate((freqs, freqs), axis=-1)           # (B, S, D)
    return jnp.cos(emb).astype(dtype), jnp.sin(emb).astype(dtype)


# ------------------------------------------------------------------
# One-time parameter layout prep: weight transposes, QKV fusion and folding of
# the 1/sqrt(head_dim) attention scale into the q-norm gamma/beta.
# ------------------------------------------------------------------
def prepare_params(raw, head_dim):
    scale = 1.0 / math.sqrt(head_dim)
    return {
        "wqkv_t": jnp.concatenate([raw["wq"].T, raw["wk"].T, raw["wv"].T], axis=1),
        "wo_t": raw["wo"].T,
        "q_norm_w": raw["q_norm_w"] * scale,
        "q_norm_b": raw["q_norm_b"] * scale,
        "k_norm_w": raw["k_norm_w"], "k_norm_b": raw["k_norm_b"],
    }


# ------------------------------------------------------------------
# ChameleonFlashAttention2 forward (eval mode, no cache, no padding mask).
# ------------------------------------------------------------------
def chameleon_flash_attention2(params, hidden_states, position_ids, cfg):
    B, S, hidden = hidden_states.shape
    H, KVH, D = cfg["num_heads"], cfg["num_kv_heads"], cfg["head_dim"]
    M = B * S

    x2d = hidden_states.reshape(M, hidden)
    qkv = matmul(x2d, params["wqkv_t"])                       # fused q/k/v projection
    q = qkv[:, : H * D]
    k = qkv[:, H * D:(H + KVH) * D]
    v = qkv[:, (H + KVH) * D:]

    cos, sin = rotary_cos_sin(position_ids, D, cfg["rope_theta"], hidden_states.dtype)
    cos2, sin2 = cos.reshape(M, D), sin.reshape(M, D)

    # LayerNorm(+1/sqrt(D) folded for q) + RoPE, stays in (T, H, D) layout.
    q = qknorm_rope(q.reshape(M, H, D), params["q_norm_w"], params["q_norm_b"],
                    cos2, sin2)
    k = qknorm_rope(k.reshape(M, KVH, D), params["k_norm_w"], params["k_norm_b"],
                    cos2, sin2)

    # All reshapes below are layout-preserving (no transposes / HBM shuffles).
    q = q.reshape(B, S, H, D)
    k = k.reshape(B, S, KVH, D)
    v = v.reshape(B, S, KVH, D)

    attn = flash_attention(q, k, v)                           # (B, S, H, D)
    attn2d = attn.reshape(M, H * D)
    return matmul(attn2d, params["wo_t"]).reshape(B, S, hidden)


# ------------------------------------------------------------------
# Pure-JAX reference (same math, no Pallas) for correctness check.
# ------------------------------------------------------------------
def reference(params, hidden_states, position_ids, cfg):
    B, S, hidden = hidden_states.shape
    H, KVH, D = cfg["num_heads"], cfg["num_kv_heads"], cfg["head_dim"]

    x2d = hidden_states.reshape(B * S, hidden)
    q = x2d @ params["wq"].T
    k = x2d @ params["wk"].T
    v = x2d @ params["wv"].T

    def ln(x, w, b):
        mean = jnp.mean(x, axis=-1, keepdims=True)
        var = jnp.mean((x - mean) ** 2, axis=-1, keepdims=True)
        return (x - mean) / jnp.sqrt(var + 1e-5) * w + b

    q = ln(q.reshape(B * S, H, D), params["q_norm_w"], params["q_norm_b"])
    k = ln(k.reshape(B * S, KVH, D), params["k_norm_w"], params["k_norm_b"])

    cos, sin = rotary_cos_sin(position_ids, D, cfg["rope_theta"], hidden_states.dtype)
    cos = cos.reshape(B * S, 1, D)
    sin = sin.reshape(B * S, 1, D)

    def rot_half(x):
        return jnp.concatenate((-x[..., D // 2:], x[..., : D // 2]), axis=-1)

    q = q * cos + rot_half(q) * sin
    k = k * cos + rot_half(k) * sin

    q = q.reshape(B, S, H, D).transpose(0, 2, 1, 3)
    k = k.reshape(B, S, KVH, D).transpose(0, 2, 1, 3)
    v = v.reshape(B, S, KVH, D).transpose(0, 2, 1, 3)
    k = jnp.repeat(k, H // KVH, axis=1)
    v = jnp.repeat(v, H // KVH, axis=1)

    s = jnp.einsum("bhqd,bhkd->bhqk", q, k) / math.sqrt(D)
    causal = jnp.tril(jnp.ones((S, S), dtype=bool))
    s = jnp.where(causal[None, None], s, -jnp.inf)
    p = jax.nn.softmax(s.astype(jnp.float32), axis=-1).astype(q.dtype)
    attn = jnp.einsum("bhqk,bhkd->bhqd", p, v)
    attn = attn.transpose(0, 2, 1, 3).reshape(B * S, H * D)
    return (attn @ params["wo"].T).reshape(B, S, hidden)


# ------------------------------------------------------------------
if __name__ == "__main__":
    cfg = dict(
        hidden_size=64,
        num_heads=4,
        num_kv_heads=2,
        head_dim=16,
        rope_theta=10000.0,
    )
    B, S = 2, 8
    H, KVH, D, hidden = (cfg["num_heads"], cfg["num_kv_heads"],
                         cfg["head_dim"], cfg["hidden_size"])

    key = jax.random.PRNGKey(0)
    keys = jax.random.split(key, 10)
    raw_params = {
        "wq": jax.random.normal(keys[0], (H * D, hidden), jnp.float32) * 0.05,
        "wk": jax.random.normal(keys[1], (KVH * D, hidden), jnp.float32) * 0.05,
        "wv": jax.random.normal(keys[2], (KVH * D, hidden), jnp.float32) * 0.05,
        "wo": jax.random.normal(keys[3], (hidden, hidden), jnp.float32) * 0.05,
        "q_norm_w": 1.0 + 0.1 * jax.random.normal(keys[4], (H, D), jnp.float32),
        "q_norm_b": 0.1 * jax.random.normal(keys[5], (H, D), jnp.float32),
        "k_norm_w": 1.0 + 0.1 * jax.random.normal(keys[6], (KVH, D), jnp.float32),
        "k_norm_b": 0.1 * jax.random.normal(keys[7], (KVH, D), jnp.float32),
    }
    params = prepare_params(raw_params, D)

    hidden_states = jax.random.normal(keys[8], (B, S, hidden), jnp.float32)
    position_ids = jnp.broadcast_to(jnp.arange(S, dtype=jnp.int32)[None, :], (B, S))

    out = chameleon_flash_attention2(params, hidden_states, position_ids, cfg)
    out = jax.block_until_ready(out)

    ref = jax.block_until_ready(reference(raw_params, hidden_states, position_ids, cfg))
    np.testing.assert_allclose(np.asarray(out), np.asarray(ref), rtol=3e-2, atol=3e-2)

    print("KERNEL_OK")
</pallas_src>

<mosaic_0001>
module attributes {stable_mosaic.version = 11 : i64} {
  func.func @_matmul_kernel(%arg0: i32, %arg1: i32, %arg2: i32, %arg3: memref<16x64xf32, #tpu.memory_space<vmem>>, %arg4: memref<64x128xf32, #tpu.memory_space<vmem>>, %arg5: memref<16x128xf32, #tpu.memory_space<vmem>>, %arg6: memref<16x128xf32, #tpu.memory_space<vmem>>) attributes {dimension_semantics = [#tpu.dimension_semantics<parallel>, #tpu.dimension_semantics<parallel>, #tpu.dimension_semantics<arbitrary>], iteration_bounds = array<i64: 1, 1, 1>, scalar_prefetch = 0 : i64, scratch_operands = 1 : i64, tpu.core_type = #tpu.core_type<tc>, window_params = [{transform_indices = @transform_0, window_bounds = array<i64: 16, 64>}, {transform_indices = @transform_1, window_bounds = array<i64: 64, 128>}, {transform_indices = @transform_2, window_bounds = array<i64: 16, 128>}]} {
    %c0_i32 = arith.constant 0 : i32
    %0 = arith.cmpi eq, %arg2, %c0_i32 : i32
    %1 = arith.extui %0 : i1 to i32
    %c0_i32_0 = arith.constant 0 : i32
    %2 = arith.cmpi ne, %1, %c0_i32_0 : i32
    scf.if %2 {
      %cst_10 = arith.constant 0.000000e+00 : f32
      %12 = vector.broadcast %cst_10 : f32 to vector<16x128xf32>
      %c0_11 = arith.constant 0 : index
      %c0_12 = arith.constant 0 : index
      %13 = vector.load %arg6[%c0_11, %c0_12] : memref<16x128xf32, #tpu.memory_space<vmem>>, vector<16x128xf32>
      tpu.vector_store %arg6[%c0_11, %c0_12], %12 {strides = array<i32>} : memref<16x128xf32, #tpu.memory_space<vmem>>, vector<16x128xf32>,
    } else {
    }
    %c0 = arith.constant 0 : index
    %c0_1 = arith.constant 0 : index
    %3 = vector.load %arg6[%c0, %c0_1] : memref<16x128xf32, #tpu.memory_space<vmem>>, vector<16x128xf32>
    %c0_2 = arith.constant 0 : index
    %c0_3 = arith.constant 0 : index
    %4 = vector.load %arg3[%c0_2, %c0_3] : memref<16x64xf32, #tpu.memory_space<vmem>>, vector<16x64xf32>
    %c0_4 = arith.constant 0 : index
    %c0_5 = arith.constant 0 : index
    %5 = vector.load %arg4[%c0_4, %c0_5] : memref<64x128xf32, #tpu.memory_space<vmem>>, vector<64x128xf32>
    %cst = arith.constant dense<0.000000e+00> : vector<16x128xf32>
    %6 = tpu.matmul %4, %5, %cst {dimension_numbers = #tpu.dot_dimension_numbers<[1], [0], [0], [1], [0, 0, 1, 1], [], []>} : vector<16x64xf32>, vector<64x128xf32>, vector<16x128xf32> -> vector<16x128xf32>
    %7 = arith.addf %3, %6 : vector<16x128xf32>
    %c0_6 = arith.constant 0 : index
    %c0_7 = arith.constant 0 : index
    %8 = vector.load %arg6[%c0_6, %c0_7] : memref<16x128xf32, #tpu.memory_space<vmem>>, vector<16x128xf32>
    tpu.vector_store %arg6[%c0_6, %c0_7], %7 {strides = array<i32>} : memref<16x128xf32, #tpu.memory_space<vmem>>, vector<16x128xf32>,
    %c0_i32_8 = arith.constant 0 : i32
    %9 = arith.cmpi eq, %arg2, %c0_i32_8 : i32
    %10 = arith.extui %9 : i1 to i32
    %c0_i32_9 = arith.constant 0 : i32
    %11 = arith.cmpi ne, %10, %c0_i32_9 : i32
    scf.if %11 {
      %c0_10 = arith.constant 0 : index
      %c0_11 = arith.constant 0 : index
      %12 = vector.load %arg6[%c0_10, %c0_11] : memref<16x128xf32, #tpu.memory_space<vmem>>, vector<16x128xf32>
      %c0_12 = arith.constant 0 : index
      %c0_13 = arith.constant 0 : index
      %13 = vector.load %arg5[%c0_12, %c0_13] : memref<16x128xf32, #tpu.memory_space<vmem>>, vector<16x128xf32>
      tpu.vector_store %arg5[%c0_12, %c0_13], %12 {strides = array<i32>} : memref<16x128xf32, #tpu.memory_space<vmem>>, vector<16x128xf32>,
    } else {
    }
    return
  }
  func.func @transform_0(%arg0: i32, %arg1: i32, %arg2: i32) -> (i32, i32) {
    %c0_i32 = arith.constant 0 : i32
    return %arg0, %arg2 : i32, i32
  }
  func.func @transform_1(%arg0: i32, %arg1: i32, %arg2: i32) -> (i32, i32) {
    %c0_i32 = arith.constant 0 : i32
    return %arg2, %arg1 : i32, i32
  }
  func.func @transform_2(%arg0: i32, %arg1: i32, %arg2: i32) -> (i32, i32) {
    %c0_i32 = arith.constant 0 : i32
    return %arg0, %arg1 : i32, i32
  }
}

</mosaic_0001>

<llo_original>
// kernel: tpu_custom_call.1
$region0: #{tpu_custom_call.1}
  #allocation0 [shape = 'u32[]', space=smem, size = 0x4, offset = 0x4, fixed_abs, tag = 'smem constant byte address 0x4 - core index']
  #allocation1 [shape = 'u32[144,128]{1,0:T(1,128)}', space=vmem, size = 0x12000, scoped, tag = 'internal scratch']
  #allocation2 [shape = 'f32[16,128]{1,0:T(8,128)}', space=vmem, size = 0x2000, scoped, tag = 'scratch operand']
  %s0 = inlined_call_operand.hbm [shape: f32[16,64], index: 0, kind: input, shape index: {}]
  %s1 = inlined_call_operand.hbm [shape: f32[64,128], index: 1, kind: input, shape index: {}]
  %s2 = inlined_call_operand.hbm [shape: f32[16,128], index: 2, kind: output, shape index: {}]
  %s3 = sld [smem:[#allocation0]]
  $region34: #{tpu_custom_call.1} parent=0
    _
  %s5 = ssub.s32 1, %s3
  %s6 = scalar_select 0, %s5, %s3
  $region1: #{tpu_custom_call.1} parent=0
    #allocation3 [shape = 'u8[8192]{0}', space=vmem, size = 0x2000, scoped, tag = 'input window, operand 0, single buffered']
    #allocation4 [shape = 's32[1]{0}', space=sflag, size = 0x4, scoped, tag = 'scoped memory for tpu_custom_call.1']
    #allocation5 [shape = 's32[1]{0}', space=sflag, size = 0x4, scoped, tag = 'scoped memory for tpu_custom_call.1']
    #allocation6 [shape = 'u8[32768]{0}', space=vmem, size = 0x8000, scoped, tag = 'input window, operand 1, single buffered']
    #allocation7 [shape = 's32[1]{0}', space=sflag, size = 0x4, scoped, tag = 'scoped memory for tpu_custom_call.1']
    #allocation8 [shape = 'u8[8192]{0}', space=vmem, size = 0x2000, scoped, tag = 'output window, operand 0, single buffered']
    %7 = vsyncpa [#allocation4], 0
    %8 = vsyncpa [#allocation7], 0
    %9 = vsyncpa [#allocation5], 0
    // Predicated region
    $region2: #{tpu_custom_call.1} parent=1 // pred_check
      _
    $region3: #{tpu_custom_call.1} parent=1 // pred_check_branch
      %11 = sbr.rel (0) target = $region5
    $region4: #{tpu_custom_call.1} parent=1 // pred_region
      %s13 = ssub.s32 256, 256
      %14 = vsyncadd [#allocation4], %s13
      %s15 = sshll.u32 [#allocation3], 4
      %s16 = int_to_ptr.vmem [resolvable:$true] %s15
      %21 = dma.hbm_to_vmem [thread:$0]  %s0, 256, %s16, [#allocation4], 128, 128, 8
    $region5: #{tpu_custom_call.1} parent=1 // pred_fallthru
      _
    // Predicated region
    $region6: #{tpu_custom_call.1} parent=1 // pred_check
      _
    $region7: #{tpu_custom_call.1} parent=1 // pred_check_branch
      %23 = sbr.rel (0) target = $region9
    $region8: #{tpu_custom_call.1} parent=1 // pred_region
      %s25 = ssub.s32 1024, 1024
      %26 = vsyncadd [#allocation7], %s25
      %s27 = sshll.u32 [#allocation6], 4
      %s28 = int_to_ptr.vmem [resolvable:$true] %s27
      %33 = dma.hbm_to_vmem [thread:$0]  %s1, 1024, %s28, [#allocation7], 128, 128, 8
    $region9: #{tpu_custom_call.1} parent=1 // pred_fallthru
      _
    // Predicated region
    $region10: #{tpu_custom_call.1} parent=1 // pred_check
      _
    $region11: #{tpu_custom_call.1} parent=1 // pred_check_branch
      %35 = sbr.rel (0) target = $region13
    $region12: #{tpu_custom_call.1} parent=1 // pred_region
      %36 = dma.done [#allocation4], 256
    $region13: #{tpu_custom_call.1} parent=1 // pred_fallthru
      _
    // Predicated region
    $region14: #{tpu_custom_call.1} parent=1 // pred_check
      _
    $region15: #{tpu_custom_call.1} parent=1 // pred_check_branch
      %38 = sbr.rel (0) target = $region17
    $region16: #{tpu_custom_call.1} parent=1 // pred_region
      %39 = dma.done [#allocation7], 1024
    $region17: #{tpu_custom_call.1} parent=1 // pred_fallthru
      _
    %p40 = scmp.eq.s32.totalorder 0, 0
    // Predicated region
    $region18: #{tpu_custom_call.1} parent=1 // pred_check
      %p41 = pneg %p40
    $region19: #{tpu_custom_call.1} parent=1 // pred_check_branch
      %43 = sbr.rel (%p41) target = $region21
    $region20: #{tpu_custom_call.1} parent=1 // pred_region
      %44 = vst [vmem:[#allocation2] sm:$0xff] 0.0
      %45 = vst [vmem:[#allocation2 + $0x8] sm:$0xff] 0.0
    $region21: #{tpu_custom_call.1} parent=1 // pred_fallthru
      _
    %v46 = vld [vmem:[#allocation2] sm:$0xff]
    %v47 = vld [vmem:[#allocation2 + $0x8] sm:$0xff]
    %v48 = vld [vmem:[#allocation3] sm:$0xff]
    %v49 = vld [vmem:[#allocation3 + $0x8] sm:$0xff]
    %v50 = vld [vmem:[#allocation6] sm:$0xff]
    %v51 = vld [vmem:[#allocation6 + $0x8] sm:$0xff]
    %v52 = vld [vmem:[#allocation6 + $0x10] sm:$0xff]
    %v53 = vld [vmem:[#allocation6 + $0x18] sm:$0xff]
    %v54 = vld [vmem:[#allocation6 + $0x20] sm:$0xff]
    %v55 = vld [vmem:[#allocation6 + $0x28] sm:$0xff]
    %v56 = vld [vmem:[#allocation6 + $0x30] sm:$0xff]
    %v57 = vld [vmem:[#allocation6 + $0x38] sm:$0xff]
    %vm58 = vcmask 523264
    %v60 = vsel %vm58, %v48, 0
    %v63 = vsel %vm58, %v49, 0
    %65 = vmatprep.subr.mxu0 0.0
    %66 = vmatpush1.msra.mxu0 %v50
    %67 = vmatprep.subr.mxu0 0.0
    %68 = vmatpush1.msra.mxu0 %v51
    %69 = vmatprep.subr.mxu0 0.0
    %70 = vmatpush1.msra.mxu0 %v52
    %71 = vmatprep.subr.mxu0 0.0
    %72 = vmatpush1.msra.mxu0 %v53
    %73 = vmatprep.subr.mxu0 0.0
    %74 = vmatpush1.msra.mxu0 %v54
    %75 = vmatprep.subr.mxu0 0.0
    %76 = vmatpush1.msra.mxu0 %v55
    %77 = vmatprep.subr.mxu0 0.0
    %78 = vmatpush1.msra.mxu0 %v56
    %79 = vmatprep.subr.mxu0 0.0
    %80 = vmatpush1.msra.mxu0 %v57
    %81 = vmatprep.subr.mxu0 0.0
    %82 = vmatpush1.msra.mxu0 0.0
    %83 = vmatprep.subr.mxu0 0.0
    %84 = vmatpush1.msra.mxu0 0.0
    %85 = vmatprep.subr.mxu0 0.0
    %86 = vmatpush1.msra.mxu0 0.0
    %87 = vmatprep.subr.mxu0 0.0
    %88 = vmatpush1.msra.mxu0 0.0
    %89 = vmatprep.subr.mxu0 0.0
    %90 = vmatpush1.msra.mxu0 0.0
    %91 = vmatprep.subr.mxu0 0.0
    %92 = vmatpush1.msra.mxu0 0.0
    %93 = vmatprep.subr.mxu0 0.0
    %94 = vmatpush1.msra.mxu0 0.0
    %95 = vmatprep.subr.mxu0 0.0
    %96 = vmatpush1.msra.mxu0 0.0
    %97 = vmatprep.subr.mxu0 0.0
    %98 = vmatpush1.msra.mxu0 0.0
    %99 = vmatprep.subr.mxu0 0.0
    %100 = vmatpush1.msra.mxu0 0.0
    %101 = vmatprep.subr.mxu0 0.0
    %102 = vmatpush1.msra.mxu0 0.0
    %103 = vmatprep.subr.mxu0 0.0
    %104 = vmatpush1.msra.mxu0 0.0
    %105 = vmatprep.subr.mxu0 0.0
    %106 = vmatpush1.msra.mxu0 0.0
    %107 = vmatprep.subr.mxu0 0.0
    %108 = vmatpush1.msra.mxu0 0.0
    %109 = vmatprep.subr.mxu0 0.0
    %110 = vmatpush1.msra.mxu0 0.0
    %111 = vmatprep.subr.mxu0 0.0
    %112 = vmatpush1.msra.mxu0 0.0
    %113 = vmatprep.subr.mxu0 0.0
    %114 = vmatpush1.msra.mxu0 0.0
    %115 = vmatprep.subr.mxu0 0.0
    %116 = vmatpush1.msra.mxu0 0.0
    %117 = vmatprep.subr.mxu0 0.0
    %118 = vmatpush1.msra.mxu0 0.0
    %119 = vmatprep.subr.mxu0 0.0
    %120 = vmatpush1.msra.mxu0 0.0
    %121 = vmatprep.subr.mxu0 0.0
    %122 = vmatpush1.msra.mxu0 0.0
    %123 = vmatprep.subr.mxu0 0.0
    %124 = vmatpush1.msra.mxu0 0.0
    %125 = vmatprep.subr.mxu0 0.0
    %126 = vmatpush1.msra.mxu0 0.0
    %127 = vmatprep.subr.mxu0 0.0
    %128 = vmatpush1.msra.mxu0 0.0
    %129 = vmatprep.mubr.f32.mxu0 0.0
    %130 = vmatmul.mubr.f32.gmra.mrb[0].mxu0 %v60
    %v131 = vpop.f32.mrb[0].mxu0
    %v132 = vadd.f32 0.0, %v131
    %v133 = vpop.f32.mrb[0].mxu0
    %134 = vmatprep.mubr.f32.mxu0 0.0
    %135 = vmatmul.mubr.f32.gmra.mrb[0].mxu0 %v63
    %v136 = vpop.f32.mrb[0].mxu0
    %v137 = vadd.f32 0.0, %v136
    %v138 = vpop.f32.mrb[0].mxu0
    %139 = vdwg.mxu0
    %v140 = vadd.f32 %v46, %v132
    %v141 = vadd.f32 %v47, %v137
    %142 = vst [vmem:[#allocation2] sm:$0xff] %v140
    %143 = vst [vmem:[#allocation2 + $0x8] sm:$0xff] %v141
    // Predicated region
    $region22: #{tpu_custom_call.1} parent=1 // pred_check
      %p144 = pneg %p40
    $region23: #{tpu_custom_call.1} parent=1 // pred_check_branch
      %146 = sbr.rel (%p144) target = $region25
    $region24: #{tpu_custom_call.1} parent=1 // pred_region
      %v147 = vld [vmem:[#allocation2] sm:$0xff]
      %v148 = vld [vmem:[#allocation2 + $0x8] sm:$0xff]
      %149 = vst [vmem:[#allocation8] sm:$0xff] %v147
      %150 = vst [vmem:[#allocation8 + $0x8] sm:$0xff] %v148
    $region25: #{tpu_custom_call.1} parent=1 // pred_fallthru
      _
    // Predicated region
    $region26: #{tpu_custom_call.1} parent=1 // pred_check
      _
    $region27: #{tpu_custom_call.1} parent=1 // pred_check_branch
      %152 = sbr.rel (0) target = $region29
    $region28: #{tpu_custom_call.1} parent=1 // pred_region
      %s154 = ssub.s32 256, 256
      %155 = vsyncadd [#allocation5], %s154
      %s156 = sshll.u32 [#allocation8], 4
      %s157 = int_to_ptr.vmem [resolvable:$true] %s156
      %162 = dma.vmem_to_hbm [thread:$0]  %s157, 256, %s2, [#allocation5], 128, 128, 8
    $region29: #{tpu_custom_call.1} parent=1 // pred_fallthru
      _
    // Predicated region
    $region30: #{tpu_custom_call.1} parent=1 // pred_check
      _
    $region31: #{tpu_custom_call.1} parent=1 // pred_check_branch
      %164 = sbr.rel (0) target = $region33
    $region32: #{tpu_custom_call.1} parent=1 // pred_region
      %165 = dma.done [#allocation5], 256
    $region33: #{tpu_custom_call.1} parent=1 // pred_fallthru
      _
    %166 = vsyncpa [#allocation4], 1
    %167 = vsyncpa [#allocation7], 1
    %168 = vsyncpa [#allocation5], 1

</llo_original>
